<compile_context>
chip_gen: v5e
topology: v5e:2x2
jax: 0.10.0
libtpu: 0.0.40
codegen_flags: <defaults>
</compile_context>

<pallas_src>
import functools

import jax
import jax.numpy as jnp
from jax.experimental import pallas as pl
from jax.experimental.pallas import tpu as pltpu


def _patch_merging_kernel(x_ref, g_ref, b_ref, w_ref, o_ref, *, eps):
    """One row-tile of PatchMerging: gather/concat -> LayerNorm -> bf16 matmul.

    x_ref: (tr, 2, Wo, 2C)  input tile; [:, 0] = even H rows ([x0|x1] channels),
                            [:, 1] = odd H rows ([x2|x3] channels)
    g_ref: (1, 4C) f32      LayerNorm gamma
    b_ref: (1, 4C) f32      LayerNorm beta
    w_ref: (4C, 2C) bf16    reduction weight, pre-transposed so we do x @ W
    o_ref: (tr, Wo, 2C)     output tile
    """
    x = x_ref[...]                                   # (tr, 2, Wo, 2C)
    tr, _, wo, c2 = x.shape

    # Flatten tokens; the channel concat reproduces torch.cat([x0,x1,x2,x3],-1).
    top = x[:, 0].reshape(tr * wo, c2)               # [x0 | x1]
    bot = x[:, 1].reshape(tr * wo, c2)               # [x2 | x3]
    xm = jnp.concatenate([top, bot], axis=-1).astype(jnp.float32)  # (tokens,4C)

    # LayerNorm over 4C (biased variance, eps inside rsqrt — PyTorch semantics).
    mean = jnp.mean(xm, axis=-1, keepdims=True)
    xc = xm - mean
    var = jnp.mean(xc * xc, axis=-1, keepdims=True)
    xn = xc * jax.lax.rsqrt(var + eps)
    xn = xn * g_ref[...] + b_ref[...]

    # Projection on the MXU: bf16 inputs, f32 accumulation (no per-step weight
    # cast — the weight arrives already in bf16 and in x @ W layout).
    y = jnp.dot(xn.astype(jnp.bfloat16), w_ref[...],
                preferred_element_type=jnp.float32)  # (tokens, 2C)
    o_ref[...] = y.reshape(tr, wo, c2).astype(o_ref.dtype)


def _pick_row_tile(BH, Wo, C, *, vmem_budget_bytes=26 << 20, max_tokens=2048):
    """Largest divisor of BH whose (rows * Wo) token tile fits the VMEM budget.

    Rough per-step model: f32 activations (double-buffered in/out) plus
    in-kernel temporaries ~96*C bytes per token; bf16 weight conservatively
    counted twice.  Keeps >= 2 grid steps when possible (v7x has 2 TensorCores).
    """
    weight_bytes = 2 * (4 * C) * (2 * C) * 2         # worst case: 2 bf16 buffers
    bytes_per_token = 96 * C
    tokens_cap = (vmem_budget_bytes - weight_bytes) // bytes_per_token
    tokens_cap = int(max(Wo, min(tokens_cap, max_tokens)))
    tr_cap = max(1, tokens_cap // Wo)
    if BH >= 2:
        tr_cap = min(tr_cap, BH // 2)                # keep the grid >= 2 steps
    tr = 1
    for d in range(1, tr_cap + 1):                   # largest divisor <= cap
        if BH % d == 0:
            tr = d
    return tr


def _patch_merging_call(x_r, gamma2d, beta2d, w_t, *, tr, Wo, C2, C4,
                        out_dtype, eps, const_pipeline_mode):
    BH = x_r.shape[0]

    def _const_spec(shape):
        index_map = lambda i: (0,) * len(shape)
        if const_pipeline_mode is None:
            return pl.BlockSpec(shape, index_map)
        # Grid-invariant operands only need a single VMEM buffer.
        return pl.BlockSpec(shape, index_map, pipeline_mode=const_pipeline_mode)

    return pl.pallas_call(
        functools.partial(_patch_merging_kernel, eps=eps),
        out_shape=jax.ShapeDtypeStruct((BH, Wo, C2), out_dtype),
        grid_spec=pltpu.PrefetchScalarGridSpec(
            num_scalar_prefetch=0,
            grid=(BH // tr,),
            in_specs=[
                # One fully-contiguous DMA per step: tr rows x (2, Wo, 2C).
                pl.BlockSpec((tr, 2, Wo, C2), lambda i: (i, 0, 0, 0)),
                _const_spec((1, C4)),        # gamma
                _const_spec((1, C4)),        # beta
                _const_spec((C4, C2)),       # weight (bf16, x @ W layout)
            ],
            out_specs=pl.BlockSpec((tr, Wo, C2), lambda i: (i, 0, 0)),
        ),
        compiler_params=pltpu.CompilerParams(
            dimension_semantics=("parallel",),
            vmem_limit_bytes=48 * 1024 * 1024,
        ),
    )(x_r, gamma2d, beta2d, w_t)


def patch_merging(x, gamma, beta, weight, *, eps=1e-5, out_dtype=None):
    """SWIN PatchMerging forward.

    x:      (B, H, W, C)
    gamma:  (4C,)    LayerNorm weight
    beta:   (4C,)    LayerNorm bias
    weight: (2C, 4C) nn.Linear weight (PyTorch convention, y = x @ W.T)
    returns (B, H//2, W//2, 2C)
    """
    B, H, W, C = x.shape
    assert H % 2 == 0 and W % 2 == 0, "Height and Width must be divisible by 2"
    Ho, Wo = H // 2, W // 2
    C2, C4 = 2 * C, 4 * C
    BH = B * Ho
    out_dtype = x.dtype if out_dtype is None else out_dtype

    # Free, contiguous reshape (no HBM copy): row p = (b, ho); dim 1 = H-row
    # parity; the last dim packs [even-W cols | odd-W cols] channels, i.e.
    #   x_r[p, 0] = [x0 | x1]   and   x_r[p, 1] = [x2 | x3].
    x_r = x.reshape(BH, 2, Wo, C2)

    gamma2d = gamma.astype(jnp.float32).reshape(1, C4)
    beta2d = beta.astype(jnp.float32).reshape(1, C4)
    # Transpose + cast once per call (fused by XLA into the bf16 cast we need
    # anyway); the kernel then does a plain x @ W on the MXU.
    w_t = weight.T.astype(jnp.bfloat16)              # (4C, 2C)

    tr = _pick_row_tile(BH, Wo, C)
    kw = dict(tr=tr, Wo=Wo, C2=C2, C4=C4, out_dtype=out_dtype, eps=eps)

    try:
        out = _patch_merging_call(x_r, gamma2d, beta2d, w_t,
                                  const_pipeline_mode=pl.Buffered(1), **kw)
    except Exception:  # Buffered(1) unsupported on this Pallas version -> default.
        out = _patch_merging_call(x_r, gamma2d, beta2d, w_t,
                                  const_pipeline_mode=None, **kw)

    return out.reshape(B, Ho, Wo, C2)


def _reference(x, gamma, beta, weight, eps=1e-5, matmul_dtype=jnp.float32):
    """Pure-JAX PatchMerging (PyTorch semantics); matmul_dtype mirrors the MXU."""
    x0 = x[:, 0::2, 0::2, :]
    x1 = x[:, 0::2, 1::2, :]
    x2 = x[:, 1::2, 0::2, :]
    x3 = x[:, 1::2, 1::2, :]
    xm = jnp.concatenate([x0, x1, x2, x3], axis=-1).astype(jnp.float32)
    mean = jnp.mean(xm, axis=-1, keepdims=True)
    var = jnp.mean((xm - mean) ** 2, axis=-1, keepdims=True)
    xn = (xm - mean) * jax.lax.rsqrt(var + eps) * gamma + beta
    return jnp.einsum("bhwc,oc->bhwo",
                      xn.astype(matmul_dtype), weight.astype(matmul_dtype),
                      preferred_element_type=jnp.float32)


if __name__ == "__main__":
    key = jax.random.PRNGKey(0)
    B, H, W, C = 2, 16, 16, 4   # input_dim = C = 4 -> 4C = 16, 2C = 8

    k_x, k_w, k_g, k_b = jax.random.split(key, 4)
    x = jax.random.normal(k_x, (B, H, W, C), dtype=jnp.float32)
    weight = jax.random.normal(k_w, (2 * C, 4 * C), dtype=jnp.float32) * 0.05
    gamma = 1.0 + 0.1 * jax.random.normal(k_g, (4 * C,), dtype=jnp.float32)
    beta = 0.1 * jax.random.normal(k_b, (4 * C,), dtype=jnp.float32)

    out = patch_merging(x, gamma, beta, weight)
    out = jax.block_until_ready(out)

    assert out.shape == (B, H // 2, W // 2, 2 * C)
    # Reference mirroring the kernel precision (f32 LayerNorm, bf16 MXU inputs).
    ref_bf16 = _reference(x, gamma, beta, weight, matmul_dtype=jnp.bfloat16)
    assert jnp.allclose(out, ref_bf16, atol=5e-3, rtol=5e-3)
    # Full-f32 PyTorch-equivalent math (looser tol due to bf16 matmul inputs).
    ref_f32 = _reference(x, gamma, beta, weight, matmul_dtype=jnp.float32)
    assert jnp.allclose(out, ref_f32, atol=3e-2, rtol=3e-2)

    print("KERNEL_OK")
</pallas_src>

<mosaic_0001>
module attributes {stable_mosaic.version = 11 : i64} {
  func.func @_patch_merging_kernel(%arg0: i32, %arg1: memref<8x2x8x8xf32, #tpu.memory_space<vmem>>, %arg2: memref<1x16xf32, #tpu.memory_space<vmem>>, %arg3: memref<1x16xf32, #tpu.memory_space<vmem>>, %arg4: memref<16x8xbf16, #tpu.memory_space<vmem>>, %arg5: memref<8x8x8xf32, #tpu.memory_space<vmem>>) attributes {dimension_semantics = [#tpu.dimension_semantics<parallel>], iteration_bounds = array<i64: 2>, scalar_prefetch = 0 : i64, scratch_operands = 0 : i64, tpu.core_type = #tpu.core_type<tc>, window_params = [{transform_indices = @transform_0, window_bounds = array<i64: 8, 2, 8, 8>}, {pipeline_mode = #tpu.pipeline_mode<synchronous>, transform_indices = @transform_1, window_bounds = array<i64: 1, 16>}, {pipeline_mode = #tpu.pipeline_mode<synchronous>, transform_indices = @transform_2, window_bounds = array<i64: 1, 16>}, {pipeline_mode = #tpu.pipeline_mode<synchronous>, transform_indices = @transform_3, window_bounds = array<i64: 16, 8>}, {transform_indices = @transform_4, window_bounds = array<i64: 8, 8, 8>}]} {
    %c0 = arith.constant 0 : index
    %c0_0 = arith.constant 0 : index
    %c0_1 = arith.constant 0 : index
    %c0_2 = arith.constant 0 : index
    %0 = vector.load %arg1[%c0, %c0_0, %c0_1, %c0_2] : memref<8x2x8x8xf32, #tpu.memory_space<vmem>>, vector<8x2x8x8xf32>
    %1 = vector.extract_strided_slice %0 {offsets = [0, 0, 0, 0], sizes = [8, 1, 8, 8], strides = [1, 1, 1, 1]} : vector<8x2x8x8xf32> to vector<8x1x8x8xf32>
    %2 = vector.shape_cast %1 : vector<8x1x8x8xf32> to vector<8x8x8xf32>
    %3 = vector.shape_cast %2 : vector<8x8x8xf32> to vector<64x8xf32>
    %4 = vector.extract_strided_slice %0 {offsets = [0, 1, 0, 0], sizes = [8, 1, 8, 8], strides = [1, 1, 1, 1]} : vector<8x2x8x8xf32> to vector<8x1x8x8xf32>
    %5 = vector.shape_cast %4 : vector<8x1x8x8xf32> to vector<8x8x8xf32>
    %6 = vector.shape_cast %5 : vector<8x8x8xf32> to vector<64x8xf32>
    %7 = tpu.concatenate %3, %6 in 1 : vector<64x8xf32>, vector<64x8xf32> -> vector<64x16xf32>
    %cst = arith.constant dense<0.000000e+00> : vector<64xf32>
    %8 = vector.multi_reduction <add>, %7, %cst [1] : vector<64x16xf32> to vector<64xf32>
    %9 = vector.shape_cast %8 : vector<64xf32> to vector<64x1xf32>
    %cst_3 = arith.constant 1.600000e+01 : f32
    %10 = vector.broadcast %cst_3 : f32 to vector<64x1xf32>
    %11 = arith.divf %9, %10 : vector<64x1xf32>
    %12 = vector.broadcast %11 : vector<64x1xf32> to vector<64x16xf32>
    %13 = arith.subf %7, %12 : vector<64x16xf32>
    %14 = arith.mulf %13, %13 : vector<64x16xf32>
    %cst_4 = arith.constant dense<0.000000e+00> : vector<64xf32>
    %15 = vector.multi_reduction <add>, %14, %cst_4 [1] : vector<64x16xf32> to vector<64xf32>
    %16 = vector.shape_cast %15 : vector<64xf32> to vector<64x1xf32>
    %cst_5 = arith.constant 1.600000e+01 : f32
    %17 = vector.broadcast %cst_5 : f32 to vector<64x1xf32>
    %18 = arith.divf %16, %17 : vector<64x1xf32>
    %cst_6 = arith.constant 9.99999974E-6 : f32
    %19 = vector.broadcast %cst_6 : f32 to vector<64x1xf32>
    %20 = arith.addf %18, %19 : vector<64x1xf32>
    %21 = math.rsqrt %20 : vector<64x1xf32>
    %22 = vector.broadcast %21 : vector<64x1xf32> to vector<64x16xf32>
    %23 = arith.mulf %13, %22 : vector<64x16xf32>
    %c0_7 = arith.constant 0 : index
    %c0_8 = arith.constant 0 : index
    %24 = vector.load %arg2[%c0_7, %c0_8] : memref<1x16xf32, #tpu.memory_space<vmem>>, vector<1x16xf32>
    %25 = vector.broadcast %24 : vector<1x16xf32> to vector<64x16xf32>
    %26 = arith.mulf %23, %25 : vector<64x16xf32>
    %c0_9 = arith.constant 0 : index
    %c0_10 = arith.constant 0 : index
    %27 = vector.load %arg3[%c0_9, %c0_10] : memref<1x16xf32, #tpu.memory_space<vmem>>, vector<1x16xf32>
    %28 = vector.broadcast %27 : vector<1x16xf32> to vector<64x16xf32>
    %29 = arith.addf %26, %28 : vector<64x16xf32>
    %30 = arith.truncf %29 : vector<64x16xf32> to vector<64x16xbf16>
    %c0_11 = arith.constant 0 : index
    %c0_12 = arith.constant 0 : index
    %31 = vector.load %arg4[%c0_11, %c0_12] : memref<16x8xbf16, #tpu.memory_space<vmem>>, vector<16x8xbf16>
    %cst_13 = arith.constant dense<0.000000e+00> : vector<64x8xf32>
    %32 = tpu.matmul %30, %31, %cst_13 {dimension_numbers = #tpu.dot_dimension_numbers<[1], [0], [0], [1], [0, 0, 1, 1], [], []>} : vector<64x16xbf16>, vector<16x8xbf16>, vector<64x8xf32> -> vector<64x8xf32>
    %33 = vector.shape_cast %32 : vector<64x8xf32> to vector<8x8x8xf32>
    %c0_14 = arith.constant 0 : index
    %c0_15 = arith.constant 0 : index
    %c0_16 = arith.constant 0 : index
    %34 = vector.load %arg5[%c0_14, %c0_15, %c0_16] : memref<8x8x8xf32, #tpu.memory_space<vmem>>, vector<8x8x8xf32>
    tpu.vector_store %arg5[%c0_14, %c0_15, %c0_16], %33 {strides = array<i32>} : memref<8x8x8xf32, #tpu.memory_space<vmem>>, vector<8x8x8xf32>,
    return
  }
  func.func @transform_0(%arg0: i32) -> (i32, i32, i32, i32) {
    %c0_i32 = arith.constant 0 : i32
    %c0_i32_0 = arith.constant 0 : i32
    %c0_i32_1 = arith.constant 0 : i32
    %c0_i32_2 = arith.constant 0 : i32
    return %arg0, %c0_i32, %c0_i32_0, %c0_i32_1 : i32, i32, i32, i32
  }
  func.func @transform_1(%arg0: i32) -> (i32, i32) {
    %c0_i32 = arith.constant 0 : i32
    %c0_i32_0 = arith.constant 0 : i32
    %c0_i32_1 = arith.constant 0 : i32
    return %c0_i32, %c0_i32_0 : i32, i32
  }
  func.func @transform_2(%arg0: i32) -> (i32, i32) {
    %c0_i32 = arith.constant 0 : i32
    %c0_i32_0 = arith.constant 0 : i32
    %c0_i32_1 = arith.constant 0 : i32
    return %c0_i32, %c0_i32_0 : i32, i32
  }
  func.func @transform_3(%arg0: i32) -> (i32, i32) {
    %c0_i32 = arith.constant 0 : i32
    %c0_i32_0 = arith.constant 0 : i32
    %c0_i32_1 = arith.constant 0 : i32
    return %c0_i32, %c0_i32_0 : i32, i32
  }
  func.func @transform_4(%arg0: i32) -> (i32, i32, i32) {
    %c0_i32 = arith.constant 0 : i32
    %c0_i32_0 = arith.constant 0 : i32
    %c0_i32_1 = arith.constant 0 : i32
    return %arg0, %c0_i32, %c0_i32_0 : i32, i32, i32
  }
}

module attributes {stable_mosaic.version = 11 : i64} {
  func.func @_patch_merging_kernel(%arg0: i32, %arg1: memref<8x2x8x8xf32, #tpu.memory_space<vmem>>, %arg2: memref<1x16xf32, #tpu.memory_space<vmem>>, %arg3: memref<1x16xf32, #tpu.memory_space<vmem>>, %arg4: memref<16x8xbf16, #tpu.memory_space<vmem>>, %arg5: memref<8x8x8xf32, #tpu.memory_space<vmem>>) attributes {dimension_semantics = [#tpu.dimension_semantics<parallel>], iteration_bounds = array<i64: 2>, scalar_prefetch = 0 : i64, scratch_operands = 0 : i64, tpu.core_type = #tpu.core_type<tc>, window_params = [{transform_indices = @transform_0, window_bounds = array<i64: 8, 2, 8, 8>}, {pipeline_mode = #tpu.pipeline_mode<synchronous>, transform_indices = @transform_1, window_bounds = array<i64: 1, 16>}, {pipeline_mode = #tpu.pipeline_mode<synchronous>, transform_indices = @transform_2, window_bounds = array<i64: 1, 16>}, {pipeline_mode = #tpu.pipeline_mode<synchronous>, transform_indices = @transform_3, window_bounds = array<i64: 16, 8>}, {transform_indices = @transform_4, window_bounds = array<i64: 8, 8, 8>}]} {
    %c0 = arith.constant 0 : index
    %c0_0 = arith.constant 0 : index
    %c0_1 = arith.constant 0 : index
    %c0_2 = arith.constant 0 : index
    %0 = vector.load %arg1[%c0, %c0_0, %c0_1, %c0_2] : memref<8x2x8x8xf32, #tpu.memory_space<vmem>>, vector<8x2x8x8xf32>
    %1 = vector.extract_strided_slice %0 {offsets = [0, 0, 0, 0], sizes = [8, 1, 8, 8], strides = [1, 1, 1, 1]} : vector<8x2x8x8xf32> to vector<8x1x8x8xf32>
    %2 = vector.shape_cast %1 : vector<8x1x8x8xf32> to vector<8x8x8xf32>
    %3 = vector.shape_cast %2 : vector<8x8x8xf32> to vector<64x8xf32>
    %4 = vector.extract_strided_slice %0 {offsets = [0, 1, 0, 0], sizes = [8, 1, 8, 8], strides = [1, 1, 1, 1]} : vector<8x2x8x8xf32> to vector<8x1x8x8xf32>
    %5 = vector.shape_cast %4 : vector<8x1x8x8xf32> to vector<8x8x8xf32>
    %6 = vector.shape_cast %5 : vector<8x8x8xf32> to vector<64x8xf32>
    %7 = tpu.concatenate %3, %6 in 1 : vector<64x8xf32>, vector<64x8xf32> -> vector<64x16xf32>
    %cst = arith.constant dense<0.000000e+00> : vector<64xf32>
    %8 = vector.multi_reduction <add>, %7, %cst [1] : vector<64x16xf32> to vector<64xf32>
    %9 = vector.shape_cast %8 : vector<64xf32> to vector<64x1xf32>
    %cst_3 = arith.constant 1.600000e+01 : f32
    %10 = vector.broadcast %cst_3 : f32 to vector<64x1xf32>
    %11 = arith.divf %9, %10 : vector<64x1xf32>
    %12 = vector.broadcast %11 : vector<64x1xf32> to vector<64x16xf32>
    %13 = arith.subf %7, %12 : vector<64x16xf32>
    %14 = arith.mulf %13, %13 : vector<64x16xf32>
    %cst_4 = arith.constant dense<0.000000e+00> : vector<64xf32>
    %15 = vector.multi_reduction <add>, %14, %cst_4 [1] : vector<64x16xf32> to vector<64xf32>
    %16 = vector.shape_cast %15 : vector<64xf32> to vector<64x1xf32>
    %cst_5 = arith.constant 1.600000e+01 : f32
    %17 = vector.broadcast %cst_5 : f32 to vector<64x1xf32>
    %18 = arith.divf %16, %17 : vector<64x1xf32>
    %cst_6 = arith.constant 9.99999974E-6 : f32
    %19 = vector.broadcast %cst_6 : f32 to vector<64x1xf32>
    %20 = arith.addf %18, %19 : vector<64x1xf32>
    %21 = math.rsqrt %20 : vector<64x1xf32>
    %22 = vector.broadcast %21 : vector<64x1xf32> to vector<64x16xf32>
    %23 = arith.mulf %13, %22 : vector<64x16xf32>
    %c0_7 = arith.constant 0 : index
    %c0_8 = arith.constant 0 : index
    %24 = vector.load %arg2[%c0_7, %c0_8] : memref<1x16xf32, #tpu.memory_space<vmem>>, vector<1x16xf32>
    %25 = vector.broadcast %24 : vector<1x16xf32> to vector<64x16xf32>
    %26 = arith.mulf %23, %25 : vector<64x16xf32>
    %c0_9 = arith.constant 0 : index
    %c0_10 = arith.constant 0 : index
    %27 = vector.load %arg3[%c0_9, %c0_10] : memref<1x16xf32, #tpu.memory_space<vmem>>, vector<1x16xf32>
    %28 = vector.broadcast %27 : vector<1x16xf32> to vector<64x16xf32>
    %29 = arith.addf %26, %28 : vector<64x16xf32>
    %30 = arith.truncf %29 : vector<64x16xf32> to vector<64x16xbf16>
    %c0_11 = arith.constant 0 : index
    %c0_12 = arith.constant 0 : index
    %31 = vector.load %arg4[%c0_11, %c0_12] : memref<16x8xbf16, #tpu.memory_space<vmem>>, vector<16x8xbf16>
    %cst_13 = arith.constant dense<0.000000e+00> : vector<64x8xf32>
    %32 = tpu.matmul %30, %31, %cst_13 {dimension_numbers = #tpu.dot_dimension_numbers<[1], [0], [0], [1], [0, 0, 1, 1], [], []>} : vector<64x16xbf16>, vector<16x8xbf16>, vector<64x8xf32> -> vector<64x8xf32>
    %33 = vector.shape_cast %32 : vector<64x8xf32> to vector<8x8x8xf32>
    %c0_14 = arith.constant 0 : index
    %c0_15 = arith.constant 0 : index
    %c0_16 = arith.constant 0 : index
    %34 = vector.load %arg5[%c0_14, %c0_15, %c0_16] : memref<8x8x8xf32, #tpu.memory_space<vmem>>, vector<8x8x8xf32>
    tpu.vector_store %arg5[%c0_14, %c0_15, %c0_16], %33 {strides = array<i32>} : memref<8x8x8xf32, #tpu.memory_space<vmem>>, vector<8x8x8xf32>,
    return
  }
  func.func @transform_0(%arg0: i32) -> (i32, i32, i32, i32) {
    %c0_i32 = arith.constant 0 : i32
    %c0_i32_0 = arith.constant 0 : i32
    %c0_i32_1 = arith.constant 0 : i32
    %c0_i32_2 = arith.constant 0 : i32
    return %arg0, %c0_i32, %c0_i32_0, %c0_i32_1 : i32, i32, i32, i32
  }
  func.func @transform_1(%arg0: i32) -> (i32, i32) {
    %c0_i32 = arith.constant 0 : i32
    %c0_i32_0 = arith.constant 0 : i32
    %c0_i32_1 = arith.constant 0 : i32
    return %c0_i32, %c0_i32_0 : i32, i32
  }
  func.func @transform_2(%arg0: i32) -> (i32, i32) {
    %c0_i32 = arith.constant 0 : i32
    %c0_i32_0 = arith.constant 0 : i32
    %c0_i32_1 = arith.constant 0 : i32
    return %c0_i32, %c0_i32_0 : i32, i32
  }
  func.func @transform_3(%arg0: i32) -> (i32, i32) {
    %c0_i32 = arith.constant 0 : i32
    %c0_i32_0 = arith.constant 0 : i32
    %c0_i32_1 = arith.constant 0 : i32
    return %c0_i32, %c0_i32_0 : i32, i32
  }
  func.func @transform_4(%arg0: i32) -> (i32, i32, i32) {
    %c0_i32 = arith.constant 0 : i32
    %c0_i32_0 = arith.constant 0 : i32
    %c0_i32_1 = arith.constant 0 : i32
    return %arg0, %c0_i32, %c0_i32_0 : i32, i32, i32
  }
}

</mosaic_0001>

<llo_original>
// kernel: tpu_custom_call.1
$region0: #{tpu_custom_call.1}
  #allocation0 [shape = 'u32[]', space=smem, size = 0x4, offset = 0x4, fixed_abs, tag = 'smem constant byte address 0x4 - core index']
  #allocation1 [shape = 'u32[72,128]{1,0:T(1,128)}', space=vmem, size = 0x9000, scoped, tag = 'internal scratch']
  %s0 = inlined_call_operand.vmem [shape: f32[16,2,8,8], index: 0, kind: input, shape index: {}]
  %s1 = inlined_call_operand.vmem [shape: f32[1,16], index: 1, kind: input, shape index: {}]
  %s2 = inlined_call_operand.vmem [shape: f32[1,16], index: 2, kind: input, shape index: {}]
  %s3 = inlined_call_operand.vmem [shape: bf16[16,8], index: 3, kind: input, shape index: {}]
  %s4 = inlined_call_operand.vmem [shape: f32[16,8,8], index: 4, kind: output, shape index: {}]
  %s5 = sld [smem:[#allocation0]]
  $region49: #{tpu_custom_call.1} parent=0
    _
  %s7 = ssub.s32 1, %s5
  %s8 = scalar_select 0, %s7, %s5
  loop: start=0, step=1, limit=4
  $region2: #{tpu_custom_call.1} parent=0 // loop_pre_header
    _
  $region3: #{tpu_custom_call.1} parent=0 // loop_header
    %s10 = sphi 0, %s14
    %p11 = scmp.ge.s32.totalorder %s10, 4
    %s20 = sphi 0, %s22
    %s23 = sphi 0, %s20
    %s24 = sphi 0, %s23
    %s40 = sphi 0, %s24
    %s44 = sphi 0, %s44
    %s46 = sphi 0, %s44
    %s47 = sphi 0, %s46
    %s61 = sphi 0, %s47
    %s65 = sphi 0, %s65
    %s67 = sphi 0, %s65
    %s68 = sphi 0, %s67
    %s82 = sphi 0, %s68
    %s86 = sphi 0, %s86
    %s88 = sphi 0, %s86
    %s89 = sphi 0, %s88
    %s103 = sphi 0, %s89
    %s109 = sphi 0, %s111
    %s112 = sphi 0, %s109
    %s113 = sphi 0, %s112
    %s129 = sphi 0, %s113
  $region4: #{tpu_custom_call.1} parent=0 // loop_header_branch
    %13 = sbr.rel (%p11) target = $region8
  $region5: #{tpu_custom_call.1} parent=0 // loop_body
    %s15 = ssub.s32 %s10, 1
    %s16 = ssub.s32 %s10, 2
    %s17 = sadd.s32 %s10, 1
    %s18 = ssub.s32 %s10, %s17
    %p19 = scmp.eq.s32.totalorder %s18, 0
    %s21 = sadd.s32 %s20, 1
    %s22 = scalar_select %p19, %s20, %s21
    %p25 = pneg %p19
    %p26 = scmp.eq.s32.totalorder %s10, 1
    %p27 = por %p25, %p26
    %p28 = scmp.ne.s32.totalorder %s20, %s23
    %p29 = scmp.eq.s32.totalorder %s10, 0
    %p30 = por %p28, %p29
    %p31 = scmp.ne.s32.totalorder %s20, %s23
    %p32 = scmp.eq.s32.totalorder %s15, 1
    %p33 = por %p31, %p32
    %p34 = scmp.ne.s32.totalorder %s23, %s24
    %p35 = scmp.eq.s32.totalorder %s15, 0
    %p36 = por %p34, %p35
    %p37 = scmp.ne.s32.totalorder %s23, %s24
    %p38 = scmp.eq.s32.totalorder %s16, 1
    %p39 = por %p37, %p38
    %p41 = scmp.ne.s32.totalorder %s24, %s40
    %p42 = scmp.eq.s32.totalorder %s16, 0
    %p43 = por %p41, %p42
    %s45 = sadd.s32 %s44, 1
    %p48 = scmp.eq.s32.totalorder %s10, 1
    %p49 = scmp.ne.s32.totalorder %s44, %s46
    %p50 = scmp.eq.s32.totalorder %s10, 0
    %p51 = por %p49, %p50
    %p52 = scmp.ne.s32.totalorder %s44, %s46
    %p53 = scmp.eq.s32.totalorder %s15, 1
    %p54 = por %p52, %p53
    %p55 = scmp.ne.s32.totalorder %s46, %s47
    %p56 = scmp.eq.s32.totalorder %s15, 0
    %p57 = por %p55, %p56
    %p58 = scmp.ne.s32.totalorder %s46, %s47
    %p59 = scmp.eq.s32.totalorder %s16, 1
    %p60 = por %p58, %p59
    %p62 = scmp.ne.s32.totalorder %s47, %s61
    %p63 = scmp.eq.s32.totalorder %s16, 0
    %p64 = por %p62, %p63
    %s66 = sadd.s32 %s65, 1
    %p69 = scmp.eq.s32.totalorder %s10, 1
    %p70 = scmp.ne.s32.totalorder %s65, %s67
    %p71 = scmp.eq.s32.totalorder %s10, 0
    %p72 = por %p70, %p71
    %p73 = scmp.ne.s32.totalorder %s65, %s67
    %p74 = scmp.eq.s32.totalorder %s15, 1
    %p75 = por %p73, %p74
    %p76 = scmp.ne.s32.totalorder %s67, %s68
    %p77 = scmp.eq.s32.totalorder %s15, 0
    %p78 = por %p76, %p77
    %p79 = scmp.ne.s32.totalorder %s67, %s68
    %p80 = scmp.eq.s32.totalorder %s16, 1
    %p81 = por %p79, %p80
    %p83 = scmp.ne.s32.totalorder %s68, %s82
    %p84 = scmp.eq.s32.totalorder %s16, 0
    %p85 = por %p83, %p84
    %s87 = sadd.s32 %s86, 1
    %p90 = scmp.eq.s32.totalorder %s10, 1
    %p91 = scmp.ne.s32.totalorder %s86, %s88
    %p92 = scmp.eq.s32.totalorder %s10, 0
    %p93 = por %p91, %p92
    %p94 = scmp.ne.s32.totalorder %s86, %s88
    %p95 = scmp.eq.s32.totalorder %s15, 1
    %p96 = por %p94, %p95
    %p97 = scmp.ne.s32.totalorder %s88, %s89
    %p98 = scmp.eq.s32.totalorder %s15, 0
    %p99 = por %p97, %p98
    %p100 = scmp.ne.s32.totalorder %s88, %s89
    %p101 = scmp.eq.s32.totalorder %s16, 1
    %p102 = por %p100, %p101
    %p104 = scmp.ne.s32.totalorder %s89, %s103
    %p105 = scmp.eq.s32.totalorder %s16, 0
    %p106 = por %p104, %p105
    %s107 = ssub.s32 %s10, %s17
    %p108 = scmp.eq.s32.totalorder %s107, 0
    %s110 = sadd.s32 %s109, 1
    %s111 = scalar_select %p108, %s109, %s110
    %p114 = pneg %p108
    %p115 = scmp.eq.s32.totalorder %s10, 1
    %p116 = por %p114, %p115
    %p117 = scmp.ne.s32.totalorder %s109, %s112
    %p118 = scmp.eq.s32.totalorder %s10, 0
    %p119 = por %p117, %p118
    %p120 = scmp.ne.s32.totalorder %s109, %s112
    %p121 = scmp.eq.s32.totalorder %s15, 1
    %p122 = por %p120, %p121
    %p123 = scmp.ne.s32.totalorder %s112, %s113
    %p124 = scmp.eq.s32.totalorder %s15, 0
    %p125 = por %p123, %p124
    %p126 = scmp.ne.s32.totalorder %s112, %s113
    %p127 = scmp.eq.s32.totalorder %s16, 1
    %p128 = por %p126, %p127
    %p130 = scmp.ne.s32.totalorder %s113, %s129
    %p131 = scmp.eq.s32.totalorder %s16, 0
    %p132 = por %p130, %p131
    %p133 = scmp.le.s32.totalorder 1, %s10
    %p134 = scmp.lt.s32.totalorder %s10, 3
    %p135 = pnand %p133, %p134
    %p136 = pneg %p135
    // Predicated region
    $region9: #{tpu_custom_call.1} parent=5 // pred_check
      _
    $region10: #{tpu_custom_call.1} parent=5 // pred_check_branch
      %138 = sbr.rel (%p135) target = $region12
    $region11: #{tpu_custom_call.1} parent=5 // pred_region
      %s139 = ssub.s32 %s10, 1
      // Predicated region
      $region13: #{tpu_custom_call.1} parent=11 // pred_check
        %p140 = pneg %p57
      $region14: #{tpu_custom_call.1} parent=11 // pred_check_branch
        %142 = sbr.rel (%p140) target = $region16
      $region15: #{tpu_custom_call.1} parent=11 // pred_region
        _
      $region16: #{tpu_custom_call.1} parent=11 // pred_fallthru
        _
      // Predicated region
      $region17: #{tpu_custom_call.1} parent=11 // pred_check
        %p143 = pneg %p78
      $region18: #{tpu_custom_call.1} parent=11 // pred_check_branch
        %145 = sbr.rel (%p143) target = $region20
      $region19: #{tpu_custom_call.1} parent=11 // pred_region
        _
      $region20: #{tpu_custom_call.1} parent=11 // pred_fallthru
        _
      // Predicated region
      $region21: #{tpu_custom_call.1} parent=11 // pred_check
        %p146 = pneg %p99
      $region22: #{tpu_custom_call.1} parent=11 // pred_check_branch
        %148 = sbr.rel (%p146) target = $region24
      $region23: #{tpu_custom_call.1} parent=11 // pred_region
        _
      $region24: #{tpu_custom_call.1} parent=11 // pred_fallthru
        _
    $region12: #{tpu_custom_call.1} parent=5 // pred_fallthru
      _
    %p149 = scmp.lt.s32.totalorder %s10, 2
    // Predicated region
    $region25: #{tpu_custom_call.1} parent=5 // pred_check
      %p150 = pneg %p149
    $region26: #{tpu_custom_call.1} parent=5 // pred_check_branch
      %152 = sbr.rel (%p150) target = $region28
    $region27: #{tpu_custom_call.1} parent=5 // pred_region
      // Predicated region
      $region29: #{tpu_custom_call.1} parent=27 // pred_check
        %p153 = pneg %p30
      $region30: #{tpu_custom_call.1} parent=27 // pred_check_branch
        %155 = sbr.rel (%p153) target = $region32
      $region31: #{tpu_custom_call.1} parent=27 // pred_region
        %s156 = smul.u32 8, %s10
        %p157 = scmp.lt.s32.totalorder %s156, 15
        %s158 = scalar_select %p157, %s156, 15
        %s159 = smul.addr %s158, 2
        %s160 = smul.addr %s159, 8
        %s161 = scalar_lea.vmem %s0, %s160
        %s162 = smul.u32 8, %s10
      $region32: #{tpu_custom_call.1} parent=27 // pred_fallthru
        _
    $region28: #{tpu_custom_call.1} parent=5 // pred_fallthru
      _
    %p163 = scmp.le.s32.totalorder 1, %s10
    %p164 = scmp.lt.s32.totalorder %s10, 3
    %p165 = pnand %p163, %p164
    %p166 = pneg %p165
    // Predicated region
    $region33: #{tpu_custom_call.1} parent=5 // pred_check
      _
    $region34: #{tpu_custom_call.1} parent=5 // pred_check_branch
      %168 = sbr.rel (%p165) target = $region36
    $region35: #{tpu_custom_call.1} parent=5 // pred_region
      %s169 = ssub.s32 %s10, 1
      %s170 = smul.u32 8, %s15
      %p171 = scmp.lt.s32.totalorder %s170, 15
      %s172 = scalar_select %p171, %s170, 15
      %s173 = smul.addr %s172, 2
      %s174 = smul.addr %s173, 8
      %s175 = scalar_lea.vmem %s0, %s174
      %p176 = pneg %p36
      %p177 = pneg %p33
      %p178 = pneg %p57
      %p179 = pneg %p54
      %p180 = pneg %p78
      %p181 = pneg %p75
      %p182 = pneg %p99
      %p183 = pneg %p96
      %p184 = pneg %p125
      %p185 = pneg %p122
      %s186 = smul.u32 8, %s15
      %p187 = scmp.lt.s32.totalorder %s186, 15
      %s188 = scalar_select %p187, %s186, 15
      %s189 = smul.addr %s188, 8
      %s190 = scalar_lea.vmem %s4, %s189
      %s191 = smul.u32 8, %s15
      %p192 = scmp.lt.s32.totalorder %s191, 15
      %s193 = scalar_select %p192, %s191, 15
      %s194 = smul.addr %s193, 2
      %s195 = smul.addr %s194, 8
      %s196 = scalar_lea.vmem %s0, %s195
      %s197 = smul.u32 8, %s15
      %s198 = smul.u32 8, %s15
      %p199 = scmp.lt.s32.totalorder %s198, 15
      %s200 = scalar_select %p199, %s198, 15
      %s201 = smul.addr %s200, 8
      %s202 = scalar_lea.vmem %s4, %s201
      %s203 = smul.u32 8, %s15
      %v205 = vld [vmem:[%s196] sm:$0xff]
      %v206 = vld [vmem:[%s196 + $0x8] sm:$0xff]
      %v207 = vld [vmem:[%s196 + $0x10] sm:$0xff]
      %v208 = vld [vmem:[%s196 + $0x18] sm:$0xff]
      %v209 = vld [vmem:[%s196 + $0x20] sm:$0xff]
      %v210 = vld [vmem:[%s196 + $0x28] sm:$0xff]
      %v211 = vld [vmem:[%s196 + $0x30] sm:$0xff]
      %v212 = vld [vmem:[%s196 + $0x38] sm:$0xff]
      %v213 = vld [vmem:[%s196 + $0x40] sm:$0xff]
      %v214 = vld [vmem:[%s196 + $0x48] sm:$0xff]
      %v215 = vld [vmem:[%s196 + $0x50] sm:$0xff]
      %v216 = vld [vmem:[%s196 + $0x58] sm:$0xff]
      %v217 = vld [vmem:[%s196 + $0x60] sm:$0xff]
      %v218 = vld [vmem:[%s196 + $0x68] sm:$0xff]
      %v219 = vld [vmem:[%s196 + $0x70] sm:$0xff]
      %v220 = vld [vmem:[%s196 + $0x78] sm:$0xff]
      %229 = vrot.lane.b32.xlu0 %v206, 8
      %v230 = vpop.permute.xlu0 %229
      %231 = vrot.lane.b32.xlu0 %v208, 8
      %v232 = vpop.permute.xlu0 %231
      %233 = vrot.lane.b32.xlu0 %v210, 8
      %v234 = vpop.permute.xlu0 %233
      %235 = vrot.lane.b32.xlu0 %v212, 8
      %v236 = vpop.permute.xlu0 %235
      %237 = vrot.lane.b32.xlu0 %v214, 8
      %v238 = vpop.permute.xlu0 %237
      %239 = vrot.lane.b32.xlu0 %v216, 8
      %v240 = vpop.permute.xlu0 %239
      %241 = vrot.lane.b32.xlu0 %v218, 8
      %v242 = vpop.permute.xlu0 %241
      %243 = vrot.lane.b32.xlu0 %v220, 8
      %v244 = vpop.permute.xlu0 %243
      %vm253 = vcmask 64512
      %v254 = vsel %vm253, %v205, %v230
      %v255 = vsel %vm253, %v207, %v232
      %v256 = vsel %vm253, %v209, %v234
      %v257 = vsel %vm253, %v211, %v236
      %v258 = vsel %vm253, %v213, %v238
      %v259 = vsel %vm253, %v215, %v240
      %v260 = vsel %vm253, %v217, %v242
      %v261 = vsel %vm253, %v219, %v244
      %vm262 = vcmask 130048
      %v263 = vsel %vm262, %v254, 0.0
      %264 = vadd.xlane.f32.xlu0 %v263
      %v265 = vpop.xlane.xlu0 %264
      %v266 = vsel %vm262, %v255, 0.0
      %267 = vadd.xlane.f32.xlu0 %v266
      %v268 = vpop.xlane.xlu0 %267
      %v269 = vsel %vm262, %v256, 0.0
      %270 = vadd.xlane.f32.xlu0 %v269
      %v271 = vpop.xlane.xlu0 %270
      %v272 = vsel %vm262, %v257, 0.0
      %273 = vadd.xlane.f32.xlu0 %v272
      %v274 = vpop.xlane.xlu0 %273
      %v275 = vsel %vm262, %v258, 0.0
      %276 = vadd.xlane.f32.xlu0 %v275
      %v277 = vpop.xlane.xlu0 %276
      %v278 = vsel %vm262, %v259, 0.0
      %279 = vadd.xlane.f32.xlu0 %v278
      %v280 = vpop.xlane.xlu0 %279
      %v281 = vsel %vm262, %v260, 0.0
      %282 = vadd.xlane.f32.xlu0 %v281
      %v283 = vpop.xlane.xlu0 %282
      %v284 = vsel %vm262, %v261, 0.0
      %285 = vadd.xlane.f32.xlu0 %v284
      %v286 = vpop.xlane.xlu0 %285
      %v287 = vrcp.pop 16.0
      %v288 = vmul.f32 16.0, %v287
      %v289 = vsub.f32 1.0, %v288
      %v290 = vmul.f32 %v287, %v289
      %v291 = vadd.f32 %v287, %v290
      %vm292 = vweird.f32 %v287
      %v293 = vsel %vm292, %v287, %v291
      %v294 = vmul.f32 %v265, %v293
      %v295 = vmul.f32 %v268, %v293
      %v296 = vmul.f32 %v271, %v293
      %v297 = vmul.f32 %v274, %v293
      %v298 = vmul.f32 %v277, %v293
      %v299 = vmul.f32 %v280, %v293
      %v300 = vmul.f32 %v283, %v293
      %v301 = vmul.f32 %v286, %v293
      %v302 = vsub.f32 %v254, %v294
      %v303 = vsub.f32 %v255, %v295
      %v304 = vsub.f32 %v256, %v296
      %v305 = vsub.f32 %v257, %v297
      %v306 = vsub.f32 %v258, %v298
      %v307 = vsub.f32 %v259, %v299
      %v308 = vsub.f32 %v260, %v300
      %v309 = vsub.f32 %v261, %v301
      %v310 = vmul.f32 %v302, %v302
      %v311 = vmul.f32 %v303, %v303
      %v312 = vmul.f32 %v304, %v304
      %v313 = vmul.f32 %v305, %v305
      %v314 = vmul.f32 %v306, %v306
      %v315 = vmul.f32 %v307, %v307
      %v316 = vmul.f32 %v308, %v308
      %v317 = vmul.f32 %v309, %v309
      %v318 = vsel %vm262, %v310, 0.0
      %319 = vadd.xlane.f32.xlu0 %v318
      %v320 = vpop.xlane.xlu0 %319
      %v321 = vsel %vm262, %v311, 0.0
      %322 = vadd.xlane.f32.xlu0 %v321
      %v323 = vpop.xlane.xlu0 %322
      %v324 = vsel %vm262, %v312, 0.0
      %325 = vadd.xlane.f32.xlu0 %v324
      %v326 = vpop.xlane.xlu0 %325
      %v327 = vsel %vm262, %v313, 0.0
      %328 = vadd.xlane.f32.xlu0 %v327
      %v329 = vpop.xlane.xlu0 %328
      %v330 = vsel %vm262, %v314, 0.0
      %331 = vadd.xlane.f32.xlu0 %v330
      %v332 = vpop.xlane.xlu0 %331
      %v333 = vsel %vm262, %v315, 0.0
      %334 = vadd.xlane.f32.xlu0 %v333
      %v335 = vpop.xlane.xlu0 %334
      %v336 = vsel %vm262, %v316, 0.0
      %337 = vadd.xlane.f32.xlu0 %v336
      %v338 = vpop.xlane.xlu0 %337
      %v339 = vsel %vm262, %v317, 0.0
      %340 = vadd.xlane.f32.xlu0 %v339
      %v341 = vpop.xlane.xlu0 %340
      %v342 = vmul.f32 %v320, %v293
      %v343 = vmul.f32 %v323, %v293
      %v344 = vmul.f32 %v326, %v293
      %v345 = vmul.f32 %v329, %v293
      %v346 = vmul.f32 %v332, %v293
      %v347 = vmul.f32 %v335, %v293
      %v348 = vmul.f32 %v338, %v293
      %v349 = vmul.f32 %v341, %v293
      %v350 = vadd.f32 %v342, 1e-05
      %v351 = vadd.f32 %v343, 1e-05
      %v352 = vadd.f32 %v344, 1e-05
      %v353 = vadd.f32 %v345, 1e-05
      %v354 = vadd.f32 %v346, 1e-05
      %v355 = vadd.f32 %v347, 1e-05
      %v356 = vadd.f32 %v348, 1e-05
      %v357 = vadd.f32 %v349, 1e-05
      %v358 = vrsqrt.pop %v350
      %v359 = vmul.f32 %v358, %v350
      %v360 = vmul.f32 %v359, %v358
      %v361 = vmul.f32 0.5, %v360
      %v362 = vsub.f32 1.5, %v361
      %v363 = vmul.f32 %v358, %v362
      %vm364 = vweird.f32 %v350
      %vm365 = vweird.f32 %v358
      %vm366 = vmor %vm364, %vm365
      %v367 = vsel %vm366, %v358, %v363
      %v368 = vrsqrt.pop %v351
      %v369 = vmul.f32 %v368, %v351
      %v370 = vmul.f32 %v369, %v368
      %v371 = vmul.f32 0.5, %v370
      %v372 = vsub.f32 1.5, %v371
      %v373 = vmul.f32 %v368, %v372
      %vm374 = vweird.f32 %v351
      %vm375 = vweird.f32 %v368
      %vm376 = vmor %vm374, %vm375
      %v377 = vsel %vm376, %v368, %v373
      %v378 = vrsqrt.pop %v352
      %v379 = vmul.f32 %v378, %v352
      %v380 = vmul.f32 %v379, %v378
      %v381 = vmul.f32 0.5, %v380
      %v382 = vsub.f32 1.5, %v381
      %v383 = vmul.f32 %v378, %v382
      %vm384 = vweird.f32 %v352
      %vm385 = vweird.f32 %v378
      %vm386 = vmor %vm384, %vm385
      %v387 = vsel %vm386, %v378, %v383
      %v388 = vrsqrt.pop %v353
      %v389 = vmul.f32 %v388, %v353
      %v390 = vmul.f32 %v389, %v388
      %v391 = vmul.f32 0.5, %v390
      %v392 = vsub.f32 1.5, %v391
      %v393 = vmul.f32 %v388, %v392
      %vm394 = vweird.f32 %v353
      %vm395 = vweird.f32 %v388
      %vm396 = vmor %vm394, %vm395
      %v397 = vsel %vm396, %v388, %v393
      %v398 = vrsqrt.pop %v354
      %v399 = vmul.f32 %v398, %v354
      %v400 = vmul.f32 %v399, %v398
      %v401 = vmul.f32 0.5, %v400
      %v402 = vsub.f32 1.5, %v401
      %v403 = vmul.f32 %v398, %v402
      %vm404 = vweird.f32 %v354
      %vm405 = vweird.f32 %v398
      %vm406 = vmor %vm404, %vm405
      %v407 = vsel %vm406, %v398, %v403
      %v408 = vrsqrt.pop %v355
      %v409 = vmul.f32 %v408, %v355
      %v410 = vmul.f32 %v409, %v408
      %v411 = vmul.f32 0.5, %v410
      %v412 = vsub.f32 1.5, %v411
      %v413 = vmul.f32 %v408, %v412
      %vm414 = vweird.f32 %v355
      %vm415 = vweird.f32 %v408
      %vm416 = vmor %vm414, %vm415
      %v417 = vsel %vm416, %v408, %v413
      %v418 = vrsqrt.pop %v356
      %v419 = vmul.f32 %v418, %v356
      %v420 = vmul.f32 %v419, %v418
      %v421 = vmul.f32 0.5, %v420
      %v422 = vsub.f32 1.5, %v421
      %v423 = vmul.f32 %v418, %v422
      %vm424 = vweird.f32 %v356
      %vm425 = vweird.f32 %v418
      %vm426 = vmor %vm424, %vm425
      %v427 = vsel %vm426, %v418, %v423
      %v428 = vrsqrt.pop %v357
      %v429 = vmul.f32 %v428, %v357
      %v430 = vmul.f32 %v429, %v428
      %v431 = vmul.f32 0.5, %v430
      %v432 = vsub.f32 1.5, %v431
      %v433 = vmul.f32 %v428, %v432
      %vm434 = vweird.f32 %v357
      %vm435 = vweird.f32 %v428
      %vm436 = vmor %vm434, %vm435
      %v437 = vsel %vm436, %v428, %v433
      %v438 = vmul.f32 %v302, %v367
      %v439 = vmul.f32 %v303, %v377
      %v440 = vmul.f32 %v304, %v387
      %v441 = vmul.f32 %v305, %v397
      %v442 = vmul.f32 %v306, %v407
      %v443 = vmul.f32 %v307, %v417
      %v444 = vmul.f32 %v308, %v427
      %v445 = vmul.f32 %v309, %v437
      %v446 = vld [vmem:[%s1] sm:$0x1]
      %v448 = vperm.slane %v446, 0
      %v450 = vmul.f32 %v438, %v448
      %v451 = vmul.f32 %v439, %v448
      %v452 = vmul.f32 %v440, %v448
      %v453 = vmul.f32 %v441, %v448
      %v454 = vmul.f32 %v442, %v448
      %v455 = vmul.f32 %v443, %v448
      %v456 = vmul.f32 %v444, %v448
      %v457 = vmul.f32 %v445, %v448
      %v458 = vld [vmem:[%s2] sm:$0x1]
      %v460 = vperm.slane %v458, 0
      %v462 = vadd.f32 %v450, %v460
      %v463 = vadd.f32 %v451, %v460
      %v464 = vadd.f32 %v452, %v460
      %v465 = vadd.f32 %v453, %v460
      %v466 = vadd.f32 %v454, %v460
      %v467 = vadd.f32 %v455, %v460
      %v468 = vadd.f32 %v456, %v460
      %v469 = vadd.f32 %v457, %v460
      %v470 = vpack.c.bf16 %v463, %v462
      %v471 = vpack.c.bf16 %v465, %v464
      %v472 = vpack.c.bf16 %v467, %v466
      %v473 = vpack.c.bf16 %v469, %v468
      %v474 = vld [vmem:[%s3] sm:$0xf]
      %v475 = vld [vmem:[%s3 + $0x4] sm:$0xf]
      %v478 = vunpack.c.l.b16 %v474
      %v479 = vunpack.c.l.b16 %v475
      %v480 = vpack.c.b16 %v479, %v478
      %v483 = vsel %vm262, %v470, 0
      %v486 = vsel %vm262, %v471, 0
      %v489 = vsel %vm262, %v472, 0
      %v492 = vsel %vm262, %v473, 0
      %494 = vmatpush.bf16.msra.mxu0 0
      %495 = vmatpush.bf16.msra.mxu0 0
      %496 = vmatpush.bf16.msra.mxu0 0
      %497 = vmatpush.bf16.msra.mxu0 0
      %498 = vmatpush.bf16.msra.mxu0 0
      %499 = vmatpush.bf16.msra.mxu0 0
      %500 = vmatpush.bf16.msra.mxu0 0
      %501 = vmatpush.bf16.msra.mxu0 %v480
      %502 = vmatmul.bf16.gmra.mxu0 %v483
      %v503 = vpop.f32.mrf.mxu0
      %v504 = vadd.f32 0.0, %v503
      %v505 = vpop.f32.mrf.mxu0
      %v506 = vadd.f32 0.0, %v505
      %507 = vmatmul.bf16.gmra.mxu0 %v486
      %v508 = vpop.f32.mrf.mxu0
      %v509 = vadd.f32 0.0, %v508
      %v510 = vpop.f32.mrf.mxu0
      %v511 = vadd.f32 0.0, %v510
      %512 = vmatmul.bf16.gmra.mxu0 %v489
      %v513 = vpop.f32.mrf.mxu0
      %v514 = vadd.f32 0.0, %v513
      %v515 = vpop.f32.mrf.mxu0
      %v516 = vadd.f32 0.0, %v515
      %517 = vmatmul.bf16.gmra.mxu0 %v492
      %v518 = vpop.f32.mrf.mxu0
      %v519 = vadd.f32 0.0, %v518
      %v520 = vpop.f32.mrf.mxu0
      %v521 = vadd.f32 0.0, %v520
      %522 = vdwg.mxu0
      %523 = vst.msk [vmem:[%s202] sm:$0xff] %vm253, %v504
      %524 = vst.msk [vmem:[%s202 + $0x8] sm:$0xff] %vm253, %v506
      %525 = vst.msk [vmem:[%s202 + $0x10] sm:$0xff] %vm253, %v509
      %526 = vst.msk [vmem:[%s202 + $0x18] sm:$0xff] %vm253, %v511
      %527 = vst.msk [vmem:[%s202 + $0x20] sm:$0xff] %vm253, %v514
      %528 = vst.msk [vmem:[%s202 + $0x28] sm:$0xff] %vm253, %v516
      %529 = vst.msk [vmem:[%s202 + $0x30] sm:$0xff] %vm253, %v519
      %530 = vst.msk [vmem:[%s202 + $0x38] sm:$0xff] %vm253, %v521
      %s531 = smul.u32 8, %s15
      %p532 = scmp.lt.s32.totalorder %s531, 15
      %s533 = scalar_select %p532, %s531, 15
      %s534 = smul.addr %s533, 8
      %s535 = scalar_lea.vmem %s4, %s534
      // Predicated region
      $region37: #{tpu_custom_call.1} parent=35 // pred_check
        %p536 = pneg %p122
      $region38: #{tpu_custom_call.1} parent=35 // pred_check_branch
        %538 = sbr.rel (%p536) target = $region40
      $region39: #{tpu_custom_call.1} parent=35 // pred_region
        %s539 = smul.u32 8, %s15
      $region40: #{tpu_custom_call.1} parent=35 // pred_fallthru
        _
    $region36: #{tpu_custom_call.1} parent=5 // pred_fallthru
      _
    %p540 = scmp.le.s32.totalorder 2, %s10
    // Predicated region
    $region41: #{tpu_custom_call.1} parent=5 // pred_check
      %p541 = pneg %p540
    $region42: #{tpu_custom_call.1} parent=5 // pred_check_branch
      %543 = sbr.rel (%p541) target = $region44
    $region43: #{tpu_custom_call.1} parent=5 // pred_region
      %s544 = ssub.s32 %s10, 2
      // Predicated region
      $region45: #{tpu_custom_call.1} parent=43 // pred_check
        %p545 = pneg %p128
      $region46: #{tpu_custom_call.1} parent=43 // pred_check_branch
        %547 = sbr.rel (%p545) target = $region48
      $region47: #{tpu_custom_call.1} parent=43 // pred_region
        %s548 = smul.u32 8, %s16
        %p549 = scmp.lt.s32.totalorder %s548, 15
        %s550 = scalar_select %p549, %s548, 15
        %s551 = smul.addr %s550, 8
        %s552 = scalar_lea.vmem %s4, %s551
      $region48: #{tpu_custom_call.1} parent=43 // pred_fallthru
        _
    $region44: #{tpu_custom_call.1} parent=5 // pred_fallthru
      _
  $region6: #{tpu_custom_call.1} parent=0 // loop_footer
    %s14 = sadd.s32 1, %s10
  $region7: #{tpu_custom_call.1} parent=0 // loop_footer_branch
    %9 = sbr.rel target = $region3
  $region8: #{tpu_custom_call.1} parent=0 // loop_exit
    _

// kernel: tpu_custom_call.1
$region0: #{tpu_custom_call.1}
  #allocation0 [shape = 'u32[]', space=smem, size = 0x4, offset = 0x4, fixed_abs, tag = 'smem constant byte address 0x4 - core index']
  #allocation1 [shape = 'u32[72,128]{1,0:T(1,128)}', space=vmem, size = 0x9000, scoped, tag = 'internal scratch']
  %s0 = inlined_call_operand.vmem [shape: f32[16,2,8,8], index: 0, kind: input, shape index: {}]
  %s1 = inlined_call_operand.vmem [shape: f32[1,16], index: 1, kind: input, shape index: {}]
  %s2 = inlined_call_operand.vmem [shape: f32[1,16], index: 2, kind: input, shape index: {}]
  %s3 = inlined_call_operand.vmem [shape: bf16[16,8], index: 3, kind: input, shape index: {}]
  %s4 = inlined_call_operand.vmem [shape: f32[16,8,8], index: 4, kind: output, shape index: {}]
  %s5 = sld [smem:[#allocation0]]
  $region49: #{tpu_custom_call.1} parent=0
    _
  %s7 = ssub.s32 1, %s5
  %s8 = scalar_select 0, %s7, %s5
  loop: start=0, step=1, limit=4
  $region2: #{tpu_custom_call.1} parent=0 // loop_pre_header
    _
  $region3: #{tpu_custom_call.1} parent=0 // loop_header
    %s10 = sphi 0, %s14
    %p11 = scmp.ge.s32.totalorder %s10, 4
    %s20 = sphi 0, %s22
    %s23 = sphi 0, %s20
    %s24 = sphi 0, %s23
    %s40 = sphi 0, %s24
    %s44 = sphi 0, %s44
    %s46 = sphi 0, %s44
    %s47 = sphi 0, %s46
    %s61 = sphi 0, %s47
    %s65 = sphi 0, %s65
    %s67 = sphi 0, %s65
    %s68 = sphi 0, %s67
    %s82 = sphi 0, %s68
    %s86 = sphi 0, %s86
    %s88 = sphi 0, %s86
    %s89 = sphi 0, %s88
    %s103 = sphi 0, %s89
    %s109 = sphi 0, %s111
    %s112 = sphi 0, %s109
    %s113 = sphi 0, %s112
    %s129 = sphi 0, %s113
  $region4: #{tpu_custom_call.1} parent=0 // loop_header_branch
    %13 = sbr.rel (%p11) target = $region8
  $region5: #{tpu_custom_call.1} parent=0 // loop_body
    %s15 = ssub.s32 %s10, 1
    %s16 = ssub.s32 %s10, 2
    %s17 = sadd.s32 %s10, 1
    %s18 = ssub.s32 %s10, %s17
    %p19 = scmp.eq.s32.totalorder %s18, 0
    %s21 = sadd.s32 %s20, 1
    %s22 = scalar_select %p19, %s20, %s21
    %p25 = pneg %p19
    %p26 = scmp.eq.s32.totalorder %s10, 1
    %p27 = por %p25, %p26
    %p28 = scmp.ne.s32.totalorder %s20, %s23
    %p29 = scmp.eq.s32.totalorder %s10, 0
    %p30 = por %p28, %p29
    %p31 = scmp.ne.s32.totalorder %s20, %s23
    %p32 = scmp.eq.s32.totalorder %s15, 1
    %p33 = por %p31, %p32
    %p34 = scmp.ne.s32.totalorder %s23, %s24
    %p35 = scmp.eq.s32.totalorder %s15, 0
    %p36 = por %p34, %p35
    %p37 = scmp.ne.s32.totalorder %s23, %s24
    %p38 = scmp.eq.s32.totalorder %s16, 1
    %p39 = por %p37, %p38
    %p41 = scmp.ne.s32.totalorder %s24, %s40
    %p42 = scmp.eq.s32.totalorder %s16, 0
    %p43 = por %p41, %p42
    %s45 = sadd.s32 %s44, 1
    %p48 = scmp.eq.s32.totalorder %s10, 1
    %p49 = scmp.ne.s32.totalorder %s44, %s46
    %p50 = scmp.eq.s32.totalorder %s10, 0
    %p51 = por %p49, %p50
    %p52 = scmp.ne.s32.totalorder %s44, %s46
    %p53 = scmp.eq.s32.totalorder %s15, 1
    %p54 = por %p52, %p53
    %p55 = scmp.ne.s32.totalorder %s46, %s47
    %p56 = scmp.eq.s32.totalorder %s15, 0
    %p57 = por %p55, %p56
    %p58 = scmp.ne.s32.totalorder %s46, %s47
    %p59 = scmp.eq.s32.totalorder %s16, 1
    %p60 = por %p58, %p59
    %p62 = scmp.ne.s32.totalorder %s47, %s61
    %p63 = scmp.eq.s32.totalorder %s16, 0
    %p64 = por %p62, %p63
    %s66 = sadd.s32 %s65, 1
    %p69 = scmp.eq.s32.totalorder %s10, 1
    %p70 = scmp.ne.s32.totalorder %s65, %s67
    %p71 = scmp.eq.s32.totalorder %s10, 0
    %p72 = por %p70, %p71
    %p73 = scmp.ne.s32.totalorder %s65, %s67
    %p74 = scmp.eq.s32.totalorder %s15, 1
    %p75 = por %p73, %p74
    %p76 = scmp.ne.s32.totalorder %s67, %s68
    %p77 = scmp.eq.s32.totalorder %s15, 0
    %p78 = por %p76, %p77
    %p79 = scmp.ne.s32.totalorder %s67, %s68
    %p80 = scmp.eq.s32.totalorder %s16, 1
    %p81 = por %p79, %p80
    %p83 = scmp.ne.s32.totalorder %s68, %s82
    %p84 = scmp.eq.s32.totalorder %s16, 0
    %p85 = por %p83, %p84
    %s87 = sadd.s32 %s86, 1
    %p90 = scmp.eq.s32.totalorder %s10, 1
    %p91 = scmp.ne.s32.totalorder %s86, %s88
    %p92 = scmp.eq.s32.totalorder %s10, 0
    %p93 = por %p91, %p92
    %p94 = scmp.ne.s32.totalorder %s86, %s88
    %p95 = scmp.eq.s32.totalorder %s15, 1
    %p96 = por %p94, %p95
    %p97 = scmp.ne.s32.totalorder %s88, %s89
    %p98 = scmp.eq.s32.totalorder %s15, 0
    %p99 = por %p97, %p98
    %p100 = scmp.ne.s32.totalorder %s88, %s89
    %p101 = scmp.eq.s32.totalorder %s16, 1
    %p102 = por %p100, %p101
    %p104 = scmp.ne.s32.totalorder %s89, %s103
    %p105 = scmp.eq.s32.totalorder %s16, 0
    %p106 = por %p104, %p105
    %s107 = ssub.s32 %s10, %s17
    %p108 = scmp.eq.s32.totalorder %s107, 0
    %s110 = sadd.s32 %s109, 1
    %s111 = scalar_select %p108, %s109, %s110
    %p114 = pneg %p108
    %p115 = scmp.eq.s32.totalorder %s10, 1
    %p116 = por %p114, %p115
    %p117 = scmp.ne.s32.totalorder %s109, %s112
    %p118 = scmp.eq.s32.totalorder %s10, 0
    %p119 = por %p117, %p118
    %p120 = scmp.ne.s32.totalorder %s109, %s112
    %p121 = scmp.eq.s32.totalorder %s15, 1
    %p122 = por %p120, %p121
    %p123 = scmp.ne.s32.totalorder %s112, %s113
    %p124 = scmp.eq.s32.totalorder %s15, 0
    %p125 = por %p123, %p124
    %p126 = scmp.ne.s32.totalorder %s112, %s113
    %p127 = scmp.eq.s32.totalorder %s16, 1
    %p128 = por %p126, %p127
    %p130 = scmp.ne.s32.totalorder %s113, %s129
    %p131 = scmp.eq.s32.totalorder %s16, 0
    %p132 = por %p130, %p131
    %p133 = scmp.le.s32.totalorder 1, %s10
    %p134 = scmp.lt.s32.totalorder %s10, 3
    %p135 = pnand %p133, %p134
    %p136 = pneg %p135
    // Predicated region
    $region9: #{tpu_custom_call.1} parent=5 // pred_check
      _
    $region10: #{tpu_custom_call.1} parent=5 // pred_check_branch
      %138 = sbr.rel (%p135) target = $region12
    $region11: #{tpu_custom_call.1} parent=5 // pred_region
      %s139 = ssub.s32 %s10, 1
      // Predicated region
      $region13: #{tpu_custom_call.1} parent=11 // pred_check
        %p140 = pneg %p57
      $region14: #{tpu_custom_call.1} parent=11 // pred_check_branch
        %142 = sbr.rel (%p140) target = $region16
      $region15: #{tpu_custom_call.1} parent=11 // pred_region
        _
      $region16: #{tpu_custom_call.1} parent=11 // pred_fallthru
        _
      // Predicated region
      $region17: #{tpu_custom_call.1} parent=11 // pred_check
        %p143 = pneg %p78
      $region18: #{tpu_custom_call.1} parent=11 // pred_check_branch
        %145 = sbr.rel (%p143) target = $region20
      $region19: #{tpu_custom_call.1} parent=11 // pred_region
        _
      $region20: #{tpu_custom_call.1} parent=11 // pred_fallthru
        _
      // Predicated region
      $region21: #{tpu_custom_call.1} parent=11 // pred_check
        %p146 = pneg %p99
      $region22: #{tpu_custom_call.1} parent=11 // pred_check_branch
        %148 = sbr.rel (%p146) target = $region24
      $region23: #{tpu_custom_call.1} parent=11 // pred_region
        _
      $region24: #{tpu_custom_call.1} parent=11 // pred_fallthru
        _
    $region12: #{tpu_custom_call.1} parent=5 // pred_fallthru
      _
    %p149 = scmp.lt.s32.totalorder %s10, 2
    // Predicated region
    $region25: #{tpu_custom_call.1} parent=5 // pred_check
      %p150 = pneg %p149
    $region26: #{tpu_custom_call.1} parent=5 // pred_check_branch
      %152 = sbr.rel (%p150) target = $region28
    $region27: #{tpu_custom_call.1} parent=5 // pred_region
      // Predicated region
      $region29: #{tpu_custom_call.1} parent=27 // pred_check
        %p153 = pneg %p30
      $region30: #{tpu_custom_call.1} parent=27 // pred_check_branch
        %155 = sbr.rel (%p153) target = $region32
      $region31: #{tpu_custom_call.1} parent=27 // pred_region
        %s156 = smul.u32 8, %s10
        %p157 = scmp.lt.s32.totalorder %s156, 15
        %s158 = scalar_select %p157, %s156, 15
        %s159 = smul.addr %s158, 2
        %s160 = smul.addr %s159, 8
        %s161 = scalar_lea.vmem %s0, %s160
        %s162 = smul.u32 8, %s10
      $region32: #{tpu_custom_call.1} parent=27 // pred_fallthru
        _
    $region28: #{tpu_custom_call.1} parent=5 // pred_fallthru
      _
    %p163 = scmp.le.s32.totalorder 1, %s10
    %p164 = scmp.lt.s32.totalorder %s10, 3
    %p165 = pnand %p163, %p164
    %p166 = pneg %p165
    // Predicated region
    $region33: #{tpu_custom_call.1} parent=5 // pred_check
      _
    $region34: #{tpu_custom_call.1} parent=5 // pred_check_branch
      %168 = sbr.rel (%p165) target = $region36
    $region35: #{tpu_custom_call.1} parent=5 // pred_region
      %s169 = ssub.s32 %s10, 1
      %s170 = smul.u32 8, %s15
      %p171 = scmp.lt.s32.totalorder %s170, 15
      %s172 = scalar_select %p171, %s170, 15
      %s173 = smul.addr %s172, 2
      %s174 = smul.addr %s173, 8
      %s175 = scalar_lea.vmem %s0, %s174
      %p176 = pneg %p36
      %p177 = pneg %p33
      %p178 = pneg %p57
      %p179 = pneg %p54
      %p180 = pneg %p78
      %p181 = pneg %p75
      %p182 = pneg %p99
      %p183 = pneg %p96
      %p184 = pneg %p125
      %p185 = pneg %p122
      %s186 = smul.u32 8, %s15
      %p187 = scmp.lt.s32.totalorder %s186, 15
      %s188 = scalar_select %p187, %s186, 15
      %s189 = smul.addr %s188, 8
      %s190 = scalar_lea.vmem %s4, %s189
      %s191 = smul.u32 8, %s15
      %p192 = scmp.lt.s32.totalorder %s191, 15
      %s193 = scalar_select %p192, %s191, 15
      %s194 = smul.addr %s193, 2
      %s195 = smul.addr %s194, 8
      %s196 = scalar_lea.vmem %s0, %s195
      %s197 = smul.u32 8, %s15
      %s198 = smul.u32 8, %s15
      %p199 = scmp.lt.s32.totalorder %s198, 15
      %s200 = scalar_select %p199, %s198, 15
      %s201 = smul.addr %s200, 8
      %s202 = scalar_lea.vmem %s4, %s201
      %s203 = smul.u32 8, %s15
      %v205 = vld [vmem:[%s196] sm:$0xff]
      %v206 = vld [vmem:[%s196 + $0x8] sm:$0xff]
      %v207 = vld [vmem:[%s196 + $0x10] sm:$0xff]
      %v208 = vld [vmem:[%s196 + $0x18] sm:$0xff]
      %v209 = vld [vmem:[%s196 + $0x20] sm:$0xff]
      %v210 = vld [vmem:[%s196 + $0x28] sm:$0xff]
      %v211 = vld [vmem:[%s196 + $0x30] sm:$0xff]
      %v212 = vld [vmem:[%s196 + $0x38] sm:$0xff]
      %v213 = vld [vmem:[%s196 + $0x40] sm:$0xff]
      %v214 = vld [vmem:[%s196 + $0x48] sm:$0xff]
      %v215 = vld [vmem:[%s196 + $0x50] sm:$0xff]
      %v216 = vld [vmem:[%s196 + $0x58] sm:$0xff]
      %v217 = vld [vmem:[%s196 + $0x60] sm:$0xff]
      %v218 = vld [vmem:[%s196 + $0x68] sm:$0xff]
      %v219 = vld [vmem:[%s196 + $0x70] sm:$0xff]
      %v220 = vld [vmem:[%s196 + $0x78] sm:$0xff]
      %229 = vrot.lane.b32.xlu0 %v206, 8
      %v230 = vpop.permute.xlu0 %229
      %231 = vrot.lane.b32.xlu0 %v208, 8
      %v232 = vpop.permute.xlu0 %231
      %233 = vrot.lane.b32.xlu0 %v210, 8
      %v234 = vpop.permute.xlu0 %233
      %235 = vrot.lane.b32.xlu0 %v212, 8
      %v236 = vpop.permute.xlu0 %235
      %237 = vrot.lane.b32.xlu0 %v214, 8
      %v238 = vpop.permute.xlu0 %237
      %239 = vrot.lane.b32.xlu0 %v216, 8
      %v240 = vpop.permute.xlu0 %239
      %241 = vrot.lane.b32.xlu0 %v218, 8
      %v242 = vpop.permute.xlu0 %241
      %243 = vrot.lane.b32.xlu0 %v220, 8
      %v244 = vpop.permute.xlu0 %243
      %vm253 = vcmask 64512
      %v254 = vsel %vm253, %v205, %v230
      %v255 = vsel %vm253, %v207, %v232
      %v256 = vsel %vm253, %v209, %v234
      %v257 = vsel %vm253, %v211, %v236
      %v258 = vsel %vm253, %v213, %v238
      %v259 = vsel %vm253, %v215, %v240
      %v260 = vsel %vm253, %v217, %v242
      %v261 = vsel %vm253, %v219, %v244
      %vm262 = vcmask 130048
      %v263 = vsel %vm262, %v254, 0.0
      %264 = vadd.xlane.f32.xlu0 %v263
      %v265 = vpop.xlane.xlu0 %264
      %v266 = vsel %vm262, %v255, 0.0
      %267 = vadd.xlane.f32.xlu0 %v266
      %v268 = vpop.xlane.xlu0 %267
      %v269 = vsel %vm262, %v256, 0.0
      %270 = vadd.xlane.f32.xlu0 %v269
      %v271 = vpop.xlane.xlu0 %270
      %v272 = vsel %vm262, %v257, 0.0
      %273 = vadd.xlane.f32.xlu0 %v272
      %v274 = vpop.xlane.xlu0 %273
      %v275 = vsel %vm262, %v258, 0.0
      %276 = vadd.xlane.f32.xlu0 %v275
      %v277 = vpop.xlane.xlu0 %276
      %v278 = vsel %vm262, %v259, 0.0
      %279 = vadd.xlane.f32.xlu0 %v278
      %v280 = vpop.xlane.xlu0 %279
      %v281 = vsel %vm262, %v260, 0.0
      %282 = vadd.xlane.f32.xlu0 %v281
      %v283 = vpop.xlane.xlu0 %282
      %v284 = vsel %vm262, %v261, 0.0
      %285 = vadd.xlane.f32.xlu0 %v284
      %v286 = vpop.xlane.xlu0 %285
      %v287 = vrcp.pop 16.0
      %v288 = vmul.f32 16.0, %v287
      %v289 = vsub.f32 1.0, %v288
      %v290 = vmul.f32 %v287, %v289
      %v291 = vadd.f32 %v287, %v290
      %vm292 = vweird.f32 %v287
      %v293 = vsel %vm292, %v287, %v291
      %v294 = vmul.f32 %v265, %v293
      %v295 = vmul.f32 %v268, %v293
      %v296 = vmul.f32 %v271, %v293
      %v297 = vmul.f32 %v274, %v293
      %v298 = vmul.f32 %v277, %v293
      %v299 = vmul.f32 %v280, %v293
      %v300 = vmul.f32 %v283, %v293
      %v301 = vmul.f32 %v286, %v293
      %v302 = vsub.f32 %v254, %v294
      %v303 = vsub.f32 %v255, %v295
      %v304 = vsub.f32 %v256, %v296
      %v305 = vsub.f32 %v257, %v297
      %v306 = vsub.f32 %v258, %v298
      %v307 = vsub.f32 %v259, %v299
      %v308 = vsub.f32 %v260, %v300
      %v309 = vsub.f32 %v261, %v301
      %v310 = vmul.f32 %v302, %v302
      %v311 = vmul.f32 %v303, %v303
      %v312 = vmul.f32 %v304, %v304
      %v313 = vmul.f32 %v305, %v305
      %v314 = vmul.f32 %v306, %v306
      %v315 = vmul.f32 %v307, %v307
      %v316 = vmul.f32 %v308, %v308
      %v317 = vmul.f32 %v309, %v309
      %v318 = vsel %vm262, %v310, 0.0
      %319 = vadd.xlane.f32.xlu0 %v318
      %v320 = vpop.xlane.xlu0 %319
      %v321 = vsel %vm262, %v311, 0.0
      %322 = vadd.xlane.f32.xlu0 %v321
      %v323 = vpop.xlane.xlu0 %322
      %v324 = vsel %vm262, %v312, 0.0
      %325 = vadd.xlane.f32.xlu0 %v324
      %v326 = vpop.xlane.xlu0 %325
      %v327 = vsel %vm262, %v313, 0.0
      %328 = vadd.xlane.f32.xlu0 %v327
      %v329 = vpop.xlane.xlu0 %328
      %v330 = vsel %vm262, %v314, 0.0
      %331 = vadd.xlane.f32.xlu0 %v330
      %v332 = vpop.xlane.xlu0 %331
      %v333 = vsel %vm262, %v315, 0.0
      %334 = vadd.xlane.f32.xlu0 %v333
      %v335 = vpop.xlane.xlu0 %334
      %v336 = vsel %vm262, %v316, 0.0
      %337 = vadd.xlane.f32.xlu0 %v336
      %v338 = vpop.xlane.xlu0 %337
      %v339 = vsel %vm262, %v317, 0.0
      %340 = vadd.xlane.f32.xlu0 %v339
      %v341 = vpop.xlane.xlu0 %340
      %v342 = vmul.f32 %v320, %v293
      %v343 = vmul.f32 %v323, %v293
      %v344 = vmul.f32 %v326, %v293
      %v345 = vmul.f32 %v329, %v293
      %v346 = vmul.f32 %v332, %v293
      %v347 = vmul.f32 %v335, %v293
      %v348 = vmul.f32 %v338, %v293
      %v349 = vmul.f32 %v341, %v293
      %v350 = vadd.f32 %v342, 1e-05
      %v351 = vadd.f32 %v343, 1e-05
      %v352 = vadd.f32 %v344, 1e-05
      %v353 = vadd.f32 %v345, 1e-05
      %v354 = vadd.f32 %v346, 1e-05
      %v355 = vadd.f32 %v347, 1e-05
      %v356 = vadd.f32 %v348, 1e-05
      %v357 = vadd.f32 %v349, 1e-05
      %v358 = vrsqrt.pop %v350
      %v359 = vmul.f32 %v358, %v350
      %v360 = vmul.f32 %v359, %v358
      %v361 = vmul.f32 0.5, %v360
      %v362 = vsub.f32 1.5, %v361
      %v363 = vmul.f32 %v358, %v362
      %vm364 = vweird.f32 %v350
      %vm365 = vweird.f32 %v358
      %vm366 = vmor %vm364, %vm365
      %v367 = vsel %vm366, %v358, %v363
      %v368 = vrsqrt.pop %v351
      %v369 = vmul.f32 %v368, %v351
      %v370 = vmul.f32 %v369, %v368
      %v371 = vmul.f32 0.5, %v370
      %v372 = vsub.f32 1.5, %v371
      %v373 = vmul.f32 %v368, %v372
      %vm374 = vweird.f32 %v351
      %vm375 = vweird.f32 %v368
      %vm376 = vmor %vm374, %vm375
      %v377 = vsel %vm376, %v368, %v373
      %v378 = vrsqrt.pop %v352
      %v379 = vmul.f32 %v378, %v352
      %v380 = vmul.f32 %v379, %v378
      %v381 = vmul.f32 0.5, %v380
      %v382 = vsub.f32 1.5, %v381
      %v383 = vmul.f32 %v378, %v382
      %vm384 = vweird.f32 %v352
      %vm385 = vweird.f32 %v378
      %vm386 = vmor %vm384, %vm385
      %v387 = vsel %vm386, %v378, %v383
      %v388 = vrsqrt.pop %v353
      %v389 = vmul.f32 %v388, %v353
      %v390 = vmul.f32 %v389, %v388
      %v391 = vmul.f32 0.5, %v390
      %v392 = vsub.f32 1.5, %v391
      %v393 = vmul.f32 %v388, %v392
      %vm394 = vweird.f32 %v353
      %vm395 = vweird.f32 %v388
      %vm396 = vmor %vm394, %vm395
      %v397 = vsel %vm396, %v388, %v393
      %v398 = vrsqrt.pop %v354
      %v399 = vmul.f32 %v398, %v354
      %v400 = vmul.f32 %v399, %v398
      %v401 = vmul.f32 0.5, %v400
      %v402 = vsub.f32 1.5, %v401
      %v403 = vmul.f32 %v398, %v402
      %vm404 = vweird.f32 %v354
      %vm405 = vweird.f32 %v398
      %vm406 = vmor %vm404, %vm405
      %v407 = vsel %vm406, %v398, %v403
      %v408 = vrsqrt.pop %v355
      %v409 = vmul.f32 %v408, %v355
      %v410 = vmul.f32 %v409, %v408
      %v411 = vmul.f32 0.5, %v410
      %v412 = vsub.f32 1.5, %v411
      %v413 = vmul.f32 %v408, %v412
      %vm414 = vweird.f32 %v355
      %vm415 = vweird.f32 %v408
      %vm416 = vmor %vm414, %vm415
      %v417 = vsel %vm416, %v408, %v413
      %v418 = vrsqrt.pop %v356
      %v419 = vmul.f32 %v418, %v356
      %v420 = vmul.f32 %v419, %v418
      %v421 = vmul.f32 0.5, %v420
      %v422 = vsub.f32 1.5, %v421
      %v423 = vmul.f32 %v418, %v422
      %vm424 = vweird.f32 %v356
      %vm425 = vweird.f32 %v418
      %vm426 = vmor %vm424, %vm425
      %v427 = vsel %vm426, %v418, %v423
      %v428 = vrsqrt.pop %v357
      %v429 = vmul.f32 %v428, %v357
      %v430 = vmul.f32 %v429, %v428
      %v431 = vmul.f32 0.5, %v430
      %v432 = vsub.f32 1.5, %v431
      %v433 = vmul.f32 %v428, %v432
      %vm434 = vweird.f32 %v357
      %vm435 = vweird.f32 %v428
      %vm436 = vmor %vm434, %vm435
      %v437 = vsel %vm436, %v428, %v433
      %v438 = vmul.f32 %v302, %v367
      %v439 = vmul.f32 %v303, %v377
      %v440 = vmul.f32 %v304, %v387
      %v441 = vmul.f32 %v305, %v397
      %v442 = vmul.f32 %v306, %v407
      %v443 = vmul.f32 %v307, %v417
      %v444 = vmul.f32 %v308, %v427
      %v445 = vmul.f32 %v309, %v437
      %v446 = vld [vmem:[%s1] sm:$0x1]
      %v448 = vperm.slane %v446, 0
      %v450 = vmul.f32 %v438, %v448
      %v451 = vmul.f32 %v439, %v448
      %v452 = vmul.f32 %v440, %v448
      %v453 = vmul.f32 %v441, %v448
      %v454 = vmul.f32 %v442, %v448
      %v455 = vmul.f32 %v443, %v448
      %v456 = vmul.f32 %v444, %v448
      %v457 = vmul.f32 %v445, %v448
      %v458 = vld [vmem:[%s2] sm:$0x1]
      %v460 = vperm.slane %v458, 0
      %v462 = vadd.f32 %v450, %v460
      %v463 = vadd.f32 %v451, %v460
      %v464 = vadd.f32 %v452, %v460
      %v465 = vadd.f32 %v453, %v460
      %v466 = vadd.f32 %v454, %v460
      %v467 = vadd.f32 %v455, %v460
      %v468 = vadd.f32 %v456, %v460
      %v469 = vadd.f32 %v457, %v460
      %v470 = vpack.c.bf16 %v463, %v462
      %v471 = vpack.c.bf16 %v465, %v464
      %v472 = vpack.c.bf16 %v467, %v466
      %v473 = vpack.c.bf16 %v469, %v468
      %v474 = vld [vmem:[%s3] sm:$0xf]
      %v475 = vld [vmem:[%s3 + $0x4] sm:$0xf]
      %v478 = vunpack.c.l.b16 %v474
      %v479 = vunpack.c.l.b16 %v475
      %v480 = vpack.c.b16 %v479, %v478
      %v483 = vsel %vm262, %v470, 0
      %v486 = vsel %vm262, %v471, 0
      %v489 = vsel %vm262, %v472, 0
      %v492 = vsel %vm262, %v473, 0
      %494 = vmatpush.bf16.msra.mxu0 0
      %495 = vmatpush.bf16.msra.mxu0 0
      %496 = vmatpush.bf16.msra.mxu0 0
      %497 = vmatpush.bf16.msra.mxu0 0
      %498 = vmatpush.bf16.msra.mxu0 0
      %499 = vmatpush.bf16.msra.mxu0 0
      %500 = vmatpush.bf16.msra.mxu0 0
      %501 = vmatpush.bf16.msra.mxu0 %v480
      %502 = vmatmul.bf16.gmra.mxu0 %v483
      %v503 = vpop.f32.mrf.mxu0
      %v504 = vadd.f32 0.0, %v503
      %v505 = vpop.f32.mrf.mxu0
      %v506 = vadd.f32 0.0, %v505
      %507 = vmatmul.bf16.gmra.mxu0 %v486
      %v508 = vpop.f32.mrf.mxu0
      %v509 = vadd.f32 0.0, %v508
      %v510 = vpop.f32.mrf.mxu0
      %v511 = vadd.f32 0.0, %v510
      %512 = vmatmul.bf16.gmra.mxu0 %v489
      %v513 = vpop.f32.mrf.mxu0
      %v514 = vadd.f32 0.0, %v513
      %v515 = vpop.f32.mrf.mxu0
      %v516 = vadd.f32 0.0, %v515
      %517 = vmatmul.bf16.gmra.mxu0 %v492
      %v518 = vpop.f32.mrf.mxu0
      %v519 = vadd.f32 0.0, %v518
      %v520 = vpop.f32.mrf.mxu0
      %v521 = vadd.f32 0.0, %v520
      %522 = vdwg.mxu0
      %523 = vst.msk [vmem:[%s202] sm:$0xff] %vm253, %v504
      %524 = vst.msk [vmem:[%s202 + $0x8] sm:$0xff] %vm253, %v506
      %525 = vst.msk [vmem:[%s202 + $0x10] sm:$0xff] %vm253, %v509
      %526 = vst.msk [vmem:[%s202 + $0x18] sm:$0xff] %vm253, %v511
      %527 = vst.msk [vmem:[%s202 + $0x20] sm:$0xff] %vm253, %v514
      %528 = vst.msk [vmem:[%s202 + $0x28] sm:$0xff] %vm253, %v516
      %529 = vst.msk [vmem:[%s202 + $0x30] sm:$0xff] %vm253, %v519
      %530 = vst.msk [vmem:[%s202 + $0x38] sm:$0xff] %vm253, %v521
      %s531 = smul.u32 8, %s15
      %p532 = scmp.lt.s32.totalorder %s531, 15
      %s533 = scalar_select %p532, %s531, 15
      %s534 = smul.addr %s533, 8
      %s535 = scalar_lea.vmem %s4, %s534
      // Predicated region
      $region37: #{tpu_custom_call.1} parent=35 // pred_check
        %p536 = pneg %p122
      $region38: #{tpu_custom_call.1} parent=35 // pred_check_branch
        %538 = sbr.rel (%p536) target = $region40
      $region39: #{tpu_custom_call.1} parent=35 // pred_region
        %s539 = smul.u32 8, %s15
      $region40: #{tpu_custom_call.1} parent=35 // pred_fallthru
        _
    $region36: #{tpu_custom_call.1} parent=5 // pred_fallthru
      _
    %p540 = scmp.le.s32.totalorder 2, %s10
    // Predicated region
    $region41: #{tpu_custom_call.1} parent=5 // pred_check
      %p541 = pneg %p540
    $region42: #{tpu_custom_call.1} parent=5 // pred_check_branch
      %543 = sbr.rel (%p541) target = $region44
    $region43: #{tpu_custom_call.1} parent=5 // pred_region
      %s544 = ssub.s32 %s10, 2
      // Predicated region
      $region45: #{tpu_custom_call.1} parent=43 // pred_check
        %p545 = pneg %p128
      $region46: #{tpu_custom_call.1} parent=43 // pred_check_branch
        %547 = sbr.rel (%p545) target = $region48
      $region47: #{tpu_custom_call.1} parent=43 // pred_region
        %s548 = smul.u32 8, %s16
        %p549 = scmp.lt.s32.totalorder %s548, 15
        %s550 = scalar_select %p549, %s548, 15
        %s551 = smul.addr %s550, 8
        %s552 = scalar_lea.vmem %s4, %s551
      $region48: #{tpu_custom_call.1} parent=43 // pred_fallthru
        _
    $region44: #{tpu_custom_call.1} parent=5 // pred_fallthru
      _
  $region6: #{tpu_custom_call.1} parent=0 // loop_footer
    %s14 = sadd.s32 1, %s10
  $region7: #{tpu_custom_call.1} parent=0 // loop_footer_branch
    %9 = sbr.rel target = $region3
  $region8: #{tpu_custom_call.1} parent=0 // loop_exit
    _

</llo_original>
